<compile_context>
chip_gen: v5e
topology: v5e:2x2
jax: 0.10.0
libtpu: 0.0.40
codegen_flags: <defaults>
</compile_context>

<pallas_src>
import jax
import jax.numpy as jnp
from jax.experimental import pallas as pl
from jax.experimental.pallas import tpu as pltpu


def _make_kernel(nb, Hh, Wh, Cin, Cout):
    wc_in = Wh * Cin
    wc_out = Wh * Cout
    M = nb * Hh
    f32 = jnp.float32

    def kernel(x_ref, w1_ref, b1_ref, w2_ref, b2_ref, o_ref):
        # x_ref : (nb, Hh, 4*Wh*Cin)   2x2 pool windows stacked on the lane dim
        # w1_ref: (3, Wh*Cin, Wh*Cout) banded (block-Toeplitz over W) weights
        # b1_ref: (1, Wh*Cout)         bias, tiled per output column
        # w2_ref: (3, Wh*Cout, Wh*Cout)
        # b2_ref: (1, Wh*Cout)
        # o_ref : (nb, Hh, Wh*Cout)    lane-packed output (w, cout) on lanes

        # --- MaxPool2d(kernel_size=2, stride=2) ------------------------------
        # max over the 4 contiguous (Wh*Cin)-lane window chunks.
        xv = x_ref[...]
        pooled = jnp.maximum(
            jnp.maximum(xv[..., 0 * wc_in:1 * wc_in],
                        xv[..., 1 * wc_in:2 * wc_in]),
            jnp.maximum(xv[..., 2 * wc_in:3 * wc_in],
                        xv[..., 3 * wc_in:4 * wc_in]),
        ).astype(f32)                                    # (nb, Hh, Wh*Cin)

        # --- Conv2d(3x3, padding=1) + bias + ReLU ----------------------------
        # Row halo (padding=1 in H) via a value-level concat of zero rows;
        # padding=1 in W is already folded into the banded weight matrices.
        # Each conv = 3 accumulated matmuls, one per kernel row kh.
        def conv3x3_relu(inp, w_ref, b_ref, c_pack):
            zrow = jnp.zeros((nb, 1, c_pack), f32)
            padded = jnp.concatenate([zrow, inp, zrow], axis=1)  # (nb, Hh+2, c)
            acc = jnp.zeros((M, wc_out), f32)
            for kh in range(3):
                rows = padded[:, kh:kh + Hh, :].reshape(M, c_pack)
                acc = acc + jnp.dot(rows, w_ref[kh],
                                    preferred_element_type=f32)
            return jnp.maximum(acc + b_ref[...], 0.0)            # (M, Wh*Cout)

        y1 = conv3x3_relu(pooled, w1_ref, b1_ref, wc_in)
        y2 = conv3x3_relu(y1.reshape(nb, Hh, wc_out), w2_ref, b2_ref, wc_out)

        o_ref[...] = y2.reshape(nb, Hh, wc_out).astype(o_ref.dtype)

    return kernel


def _banded_weight(w_hwio, Wdim):
    """HWIO (3,3,Ci,Co) -> (3, Wdim*Ci, Wdim*Co) block-Toeplitz-over-W weights.

    band[kh, wi*Ci+ci, wo*Co+co] = w_hwio[kh, wi-wo+1, ci, co] if |wi-wo| <= 1
    (0 otherwise), so a matmul against a width-packed (rows, Wdim*Ci)
    activation performs the W direction of the 3x3 conv, including the
    padding=1 boundary, for kernel row kh.
    """
    _, _, Ci, Co = w_hwio.shape
    wi = jnp.arange(Wdim)
    wo = jnp.arange(Wdim)
    # shift[kw, wi, wo] = 1 iff wi == wo + kw - 1
    shift = jnp.stack(
        [(wi[:, None] == wo[None, :] + (kw - 1)).astype(w_hwio.dtype)
         for kw in range(3)], axis=0)                    # (3, Wdim, Wdim)
    band = jnp.einsum('kio,hkcd->hicod', shift, w_hwio)  # (3, Wdim, Ci, Wdim, Co)
    return band.reshape(3, Wdim * Ci, Wdim * Co)


def block_down_unet(x_nchw, w1, b1, w2, b2):
    """x_nchw: (N, Cin, H, W) f32; w1/w2 in HWIO. Returns (N, Cout, H//2, W//2)."""
    N, Cin, H, W = x_nchw.shape
    Cout = w1.shape[3]
    assert H % 2 == 0 and W % 2 == 0, "H and W must be even for 2x2 pooling"
    Hh, Wh = H // 2, W // 2
    wc_in, wc_out = Wh * Cin, Wh * Cout

    # Batch-block size: cap at N//2 so the parallel grid extent is >= 2 when
    # N >= 2 (v7x megacore), and bound rows per step for VMEM.
    cap = max(1, N // 2)
    cap = min(cap, max(1, 256 // max(Hh, 1)))
    nb = max(d for d in range(1, N + 1) if N % d == 0 and d <= cap)
    grid_n = N // nb

    # Glue: NCHW -> (N, Hh, 4*Wh*Cin).  The four 2x2 pool-window elements are
    # stacked as contiguous (Wh*Cin)-lane chunks of the minor dim (128 dense
    # lanes for the toy shapes); inner packing is (w, cin).
    x_d = jnp.transpose(
        x_nchw.reshape(N, Cin, Hh, 2, Wh, 2),
        (0, 2, 3, 5, 4, 1)).reshape(N, Hh, 4 * wc_in)

    # Glue: banded weight matrices and width-tiled biases (built once).
    w1_band = _banded_weight(w1, Wh)                 # (3, Wh*Cin,  Wh*Cout)
    w2_band = _banded_weight(w2, Wh)                 # (3, Wh*Cout, Wh*Cout)
    b1_pack = jnp.tile(b1, Wh).reshape(1, wc_out)
    b2_pack = jnp.tile(b2, Wh).reshape(1, wc_out)

    kernel = _make_kernel(nb, Hh, Wh, Cin, Cout)

    # VMEM budget from actual buffer sizes (double-buffered I/O blocks +
    # weights) with a 4x margin and an 8 MiB floor for compiler scratch,
    # capped well below v7x's 64 MiB physical VMEM per TensorCore.
    fbytes = 4
    buf_bytes = (2 * nb * Hh * 4 * wc_in          # input block (double buffered)
                 + 2 * nb * Hh * wc_out           # output block (double buffered)
                 + 2 * (3 * wc_in * wc_out + wc_out)
                 + 2 * (3 * wc_out * wc_out + wc_out)) * fbytes
    vmem_limit = int(min(max(4 * buf_bytes, 8 << 20), 32 << 20))

    out_p = pl.pallas_call(
        kernel,
        out_shape=jax.ShapeDtypeStruct((N, Hh, wc_out), x_nchw.dtype),
        grid_spec=pltpu.PrefetchScalarGridSpec(
            num_scalar_prefetch=0,
            grid=(grid_n,),
            in_specs=[
                pl.BlockSpec((nb, Hh, 4 * wc_in), lambda n: (n, 0, 0)),
                pl.BlockSpec((3, wc_in, wc_out), lambda n: (0, 0, 0)),
                pl.BlockSpec((1, wc_out), lambda n: (0, 0)),
                pl.BlockSpec((3, wc_out, wc_out), lambda n: (0, 0, 0)),
                pl.BlockSpec((1, wc_out), lambda n: (0, 0)),
            ],
            out_specs=pl.BlockSpec((nb, Hh, wc_out), lambda n: (n, 0, 0)),
        ),
        compiler_params=pltpu.CompilerParams(
            dimension_semantics=("parallel",),
            vmem_limit_bytes=vmem_limit,
        ),
    )(x_d, w1_band, b1_pack, w2_band, b2_pack)

    # Glue: unpack (w, cout) from the lane dim and return to NCHW.
    out = out_p.reshape(N, Hh, Wh, Cout)
    return jnp.transpose(out, (0, 3, 1, 2))


def reference(x_nchw, w1, b1, w2, b2):
    """Pure-JAX reference: MaxPool2d(2,2) -> conv3x3+ReLU -> conv3x3+ReLU."""
    x = jnp.transpose(x_nchw, (0, 2, 3, 1))
    pooled = jax.lax.reduce_window(x, -jnp.inf, jax.lax.max,
                                   (1, 2, 2, 1), (1, 2, 2, 1), "VALID")
    dn1 = jax.lax.conv_dimension_numbers(pooled.shape, w1.shape,
                                         ("NHWC", "HWIO", "NHWC"))
    y = jax.lax.conv_general_dilated(pooled, w1, (1, 1), "SAME",
                                     dimension_numbers=dn1)
    y = jnp.maximum(y + b1, 0.0)
    dn2 = jax.lax.conv_dimension_numbers(y.shape, w2.shape,
                                         ("NHWC", "HWIO", "NHWC"))
    y = jax.lax.conv_general_dilated(y, w2, (1, 1), "SAME",
                                     dimension_numbers=dn2)
    y = jnp.maximum(y + b2, 0.0)
    return jnp.transpose(y, (0, 3, 1, 2))


if __name__ == "__main__":
    # Small shapes consistent with the module: batch=2, in_channels=4,
    # out_channels=8, spatial=16x16.
    N, Cin, Cout, H, W = 2, 4, 8, 16, 16

    key = jax.random.PRNGKey(0)
    kx, kw1, kb1, kw2, kb2 = jax.random.split(key, 5)

    x = jax.random.normal(kx, (N, Cin, H, W), dtype=jnp.float32)

    # Deterministic parameter init (Conv2d-style fan-in scaling); HWIO layout.
    bound1 = 1.0 / (Cin * 3 * 3) ** 0.5
    w1 = jax.random.uniform(kw1, (3, 3, Cin, Cout), jnp.float32, -bound1, bound1)
    b1 = jax.random.uniform(kb1, (Cout,), jnp.float32, -bound1, bound1)
    bound2 = 1.0 / (Cout * 3 * 3) ** 0.5
    w2 = jax.random.uniform(kw2, (3, 3, Cout, Cout), jnp.float32, -bound2, bound2)
    b2 = jax.random.uniform(kb2, (Cout,), jnp.float32, -bound2, bound2)

    out = jax.block_until_ready(block_down_unet(x, w1, b1, w2, b2))
    ref = jax.block_until_ready(reference(x, w1, b1, w2, b2))

    assert out.shape == (N, Cout, H // 2, W // 2), out.shape
    assert jnp.allclose(out, ref, atol=1e-5, rtol=1e-5), float(
        jnp.max(jnp.abs(out - ref)))

    print("KERNEL_OK")
</pallas_src>

<mosaic_0001>
module attributes {stable_mosaic.version = 11 : i64} {
  func.func @kernel(%arg0: i32, %arg1: memref<1x8x128xf32, #tpu.memory_space<vmem>>, %arg2: memref<3x32x64xf32, #tpu.memory_space<vmem>>, %arg3: memref<1x64xf32, #tpu.memory_space<vmem>>, %arg4: memref<3x64x64xf32, #tpu.memory_space<vmem>>, %arg5: memref<1x64xf32, #tpu.memory_space<vmem>>, %arg6: memref<1x8x64xf32, #tpu.memory_space<vmem>>) attributes {dimension_semantics = [#tpu.dimension_semantics<parallel>], iteration_bounds = array<i64: 2>, scalar_prefetch = 0 : i64, scratch_operands = 0 : i64, tpu.core_type = #tpu.core_type<tc>, window_params = [{transform_indices = @transform_0, window_bounds = array<i64: 1, 8, 128>}, {pipeline_mode = #tpu.pipeline_mode<synchronous>, transform_indices = @transform_1, window_bounds = array<i64: 3, 32, 64>}, {pipeline_mode = #tpu.pipeline_mode<synchronous>, transform_indices = @transform_2, window_bounds = array<i64: 1, 64>}, {pipeline_mode = #tpu.pipeline_mode<synchronous>, transform_indices = @transform_3, window_bounds = array<i64: 3, 64, 64>}, {pipeline_mode = #tpu.pipeline_mode<synchronous>, transform_indices = @transform_4, window_bounds = array<i64: 1, 64>}, {transform_indices = @transform_5, window_bounds = array<i64: 1, 8, 64>}]} {
    %c0 = arith.constant 0 : index
    %c0_0 = arith.constant 0 : index
    %c0_1 = arith.constant 0 : index
    %0 = vector.load %arg1[%c0, %c0_0, %c0_1] : memref<1x8x128xf32, #tpu.memory_space<vmem>>, vector<1x8x128xf32>
    %1 = vector.extract_strided_slice %0 {offsets = [0, 0, 0], sizes = [1, 8, 32], strides = [1, 1, 1]} : vector<1x8x128xf32> to vector<1x8x32xf32>
    %2 = vector.extract_strided_slice %0 {offsets = [0, 0, 32], sizes = [1, 8, 32], strides = [1, 1, 1]} : vector<1x8x128xf32> to vector<1x8x32xf32>
    %3 = arith.maximumf %1, %2 : vector<1x8x32xf32>
    %4 = vector.extract_strided_slice %0 {offsets = [0, 0, 64], sizes = [1, 8, 32], strides = [1, 1, 1]} : vector<1x8x128xf32> to vector<1x8x32xf32>
    %5 = vector.extract_strided_slice %0 {offsets = [0, 0, 96], sizes = [1, 8, 32], strides = [1, 1, 1]} : vector<1x8x128xf32> to vector<1x8x32xf32>
    %6 = arith.maximumf %4, %5 : vector<1x8x32xf32>
    %7 = arith.maximumf %3, %6 : vector<1x8x32xf32>
    %cst = arith.constant 0.000000e+00 : f32
    %8 = vector.broadcast %cst : f32 to vector<1x1x32xf32>
    %9 = tpu.concatenate %8, %7, %8 in 1 : vector<1x1x32xf32>, vector<1x8x32xf32>, vector<1x1x32xf32> -> vector<1x10x32xf32>
    %cst_2 = arith.constant 0.000000e+00 : f32
    %10 = vector.broadcast %cst_2 : f32 to vector<8x64xf32>
    %11 = vector.extract_strided_slice %9 {offsets = [0, 0, 0], sizes = [1, 8, 32], strides = [1, 1, 1]} : vector<1x10x32xf32> to vector<1x8x32xf32>
    %12 = vector.shape_cast %11 : vector<1x8x32xf32> to vector<8x32xf32>
    %c0_3 = arith.constant 0 : index
    %c0_4 = arith.constant 0 : index
    %c0_5 = arith.constant 0 : index
    %13 = vector.load %arg2[%c0_3, %c0_4, %c0_5] : memref<3x32x64xf32, #tpu.memory_space<vmem>>, vector<1x32x64xf32>
    %14 = vector.shape_cast %13 : vector<1x32x64xf32> to vector<32x64xf32>
    %cst_6 = arith.constant dense<0.000000e+00> : vector<8x64xf32>
    %15 = tpu.matmul %12, %14, %cst_6 {dimension_numbers = #tpu.dot_dimension_numbers<[1], [0], [0], [1], [0, 0, 1, 1], [], []>} : vector<8x32xf32>, vector<32x64xf32>, vector<8x64xf32> -> vector<8x64xf32>
    %16 = arith.addf %10, %15 : vector<8x64xf32>
    %17 = vector.extract_strided_slice %9 {offsets = [0, 1, 0], sizes = [1, 8, 32], strides = [1, 1, 1]} : vector<1x10x32xf32> to vector<1x8x32xf32>
    %18 = vector.shape_cast %17 : vector<1x8x32xf32> to vector<8x32xf32>
    %c1 = arith.constant 1 : index
    %c0_7 = arith.constant 0 : index
    %c0_8 = arith.constant 0 : index
    %19 = vector.load %arg2[%c1, %c0_7, %c0_8] : memref<3x32x64xf32, #tpu.memory_space<vmem>>, vector<1x32x64xf32>
    %20 = vector.shape_cast %19 : vector<1x32x64xf32> to vector<32x64xf32>
    %cst_9 = arith.constant dense<0.000000e+00> : vector<8x64xf32>
    %21 = tpu.matmul %18, %20, %cst_9 {dimension_numbers = #tpu.dot_dimension_numbers<[1], [0], [0], [1], [0, 0, 1, 1], [], []>} : vector<8x32xf32>, vector<32x64xf32>, vector<8x64xf32> -> vector<8x64xf32>
    %22 = arith.addf %16, %21 : vector<8x64xf32>
    %23 = vector.extract_strided_slice %9 {offsets = [0, 2, 0], sizes = [1, 8, 32], strides = [1, 1, 1]} : vector<1x10x32xf32> to vector<1x8x32xf32>
    %24 = vector.shape_cast %23 : vector<1x8x32xf32> to vector<8x32xf32>
    %c2 = arith.constant 2 : index
    %c0_10 = arith.constant 0 : index
    %c0_11 = arith.constant 0 : index
    %25 = vector.load %arg2[%c2, %c0_10, %c0_11] : memref<3x32x64xf32, #tpu.memory_space<vmem>>, vector<1x32x64xf32>
    %26 = vector.shape_cast %25 : vector<1x32x64xf32> to vector<32x64xf32>
    %cst_12 = arith.constant dense<0.000000e+00> : vector<8x64xf32>
    %27 = tpu.matmul %24, %26, %cst_12 {dimension_numbers = #tpu.dot_dimension_numbers<[1], [0], [0], [1], [0, 0, 1, 1], [], []>} : vector<8x32xf32>, vector<32x64xf32>, vector<8x64xf32> -> vector<8x64xf32>
    %28 = arith.addf %22, %27 : vector<8x64xf32>
    %c0_13 = arith.constant 0 : index
    %c0_14 = arith.constant 0 : index
    %29 = vector.load %arg3[%c0_13, %c0_14] : memref<1x64xf32, #tpu.memory_space<vmem>>, vector<1x64xf32>
    %30 = vector.broadcast %29 : vector<1x64xf32> to vector<8x64xf32>
    %31 = arith.addf %28, %30 : vector<8x64xf32>
    %cst_15 = arith.constant 0.000000e+00 : f32
    %32 = vector.broadcast %cst_15 : f32 to vector<8x64xf32>
    %33 = arith.maximumf %31, %32 : vector<8x64xf32>
    %34 = vector.shape_cast %33 : vector<8x64xf32> to vector<1x8x64xf32>
    %cst_16 = arith.constant 0.000000e+00 : f32
    %35 = vector.broadcast %cst_16 : f32 to vector<1x1x64xf32>
    %36 = tpu.concatenate %35, %34, %35 in 1 : vector<1x1x64xf32>, vector<1x8x64xf32>, vector<1x1x64xf32> -> vector<1x10x64xf32>
    %cst_17 = arith.constant 0.000000e+00 : f32
    %37 = vector.broadcast %cst_17 : f32 to vector<8x64xf32>
    %38 = vector.extract_strided_slice %36 {offsets = [0, 0, 0], sizes = [1, 8, 64], strides = [1, 1, 1]} : vector<1x10x64xf32> to vector<1x8x64xf32>
    %39 = vector.shape_cast %38 : vector<1x8x64xf32> to vector<8x64xf32>
    %c0_18 = arith.constant 0 : index
    %c0_19 = arith.constant 0 : index
    %c0_20 = arith.constant 0 : index
    %40 = vector.load %arg4[%c0_18, %c0_19, %c0_20] : memref<3x64x64xf32, #tpu.memory_space<vmem>>, vector<1x64x64xf32>
    %41 = vector.shape_cast %40 : vector<1x64x64xf32> to vector<64x64xf32>
    %cst_21 = arith.constant dense<0.000000e+00> : vector<8x64xf32>
    %42 = tpu.matmul %39, %41, %cst_21 {dimension_numbers = #tpu.dot_dimension_numbers<[1], [0], [0], [1], [0, 0, 1, 1], [], []>} : vector<8x64xf32>, vector<64x64xf32>, vector<8x64xf32> -> vector<8x64xf32>
    %43 = arith.addf %37, %42 : vector<8x64xf32>
    %44 = vector.extract_strided_slice %36 {offsets = [0, 1, 0], sizes = [1, 8, 64], strides = [1, 1, 1]} : vector<1x10x64xf32> to vector<1x8x64xf32>
    %45 = vector.shape_cast %44 : vector<1x8x64xf32> to vector<8x64xf32>
    %c1_22 = arith.constant 1 : index
    %c0_23 = arith.constant 0 : index
    %c0_24 = arith.constant 0 : index
    %46 = vector.load %arg4[%c1_22, %c0_23, %c0_24] : memref<3x64x64xf32, #tpu.memory_space<vmem>>, vector<1x64x64xf32>
    %47 = vector.shape_cast %46 : vector<1x64x64xf32> to vector<64x64xf32>
    %cst_25 = arith.constant dense<0.000000e+00> : vector<8x64xf32>
    %48 = tpu.matmul %45, %47, %cst_25 {dimension_numbers = #tpu.dot_dimension_numbers<[1], [0], [0], [1], [0, 0, 1, 1], [], []>} : vector<8x64xf32>, vector<64x64xf32>, vector<8x64xf32> -> vector<8x64xf32>
    %49 = arith.addf %43, %48 : vector<8x64xf32>
    %50 = vector.extract_strided_slice %36 {offsets = [0, 2, 0], sizes = [1, 8, 64], strides = [1, 1, 1]} : vector<1x10x64xf32> to vector<1x8x64xf32>
    %51 = vector.shape_cast %50 : vector<1x8x64xf32> to vector<8x64xf32>
    %c2_26 = arith.constant 2 : index
    %c0_27 = arith.constant 0 : index
    %c0_28 = arith.constant 0 : index
    %52 = vector.load %arg4[%c2_26, %c0_27, %c0_28] : memref<3x64x64xf32, #tpu.memory_space<vmem>>, vector<1x64x64xf32>
    %53 = vector.shape_cast %52 : vector<1x64x64xf32> to vector<64x64xf32>
    %cst_29 = arith.constant dense<0.000000e+00> : vector<8x64xf32>
    %54 = tpu.matmul %51, %53, %cst_29 {dimension_numbers = #tpu.dot_dimension_numbers<[1], [0], [0], [1], [0, 0, 1, 1], [], []>} : vector<8x64xf32>, vector<64x64xf32>, vector<8x64xf32> -> vector<8x64xf32>
    %55 = arith.addf %49, %54 : vector<8x64xf32>
    %c0_30 = arith.constant 0 : index
    %c0_31 = arith.constant 0 : index
    %56 = vector.load %arg5[%c0_30, %c0_31] : memref<1x64xf32, #tpu.memory_space<vmem>>, vector<1x64xf32>
    %57 = vector.broadcast %56 : vector<1x64xf32> to vector<8x64xf32>
    %58 = arith.addf %55, %57 : vector<8x64xf32>
    %cst_32 = arith.constant 0.000000e+00 : f32
    %59 = vector.broadcast %cst_32 : f32 to vector<8x64xf32>
    %60 = arith.maximumf %58, %59 : vector<8x64xf32>
    %61 = vector.shape_cast %60 : vector<8x64xf32> to vector<1x8x64xf32>
    %c0_33 = arith.constant 0 : index
    %c0_34 = arith.constant 0 : index
    %c0_35 = arith.constant 0 : index
    %62 = vector.load %arg6[%c0_33, %c0_34, %c0_35] : memref<1x8x64xf32, #tpu.memory_space<vmem>>, vector<1x8x64xf32>
    tpu.vector_store %arg6[%c0_33, %c0_34, %c0_35], %61 {strides = array<i32>} : memref<1x8x64xf32, #tpu.memory_space<vmem>>, vector<1x8x64xf32>,
    return
  }
  func.func @transform_0(%arg0: i32) -> (i32, i32, i32) {
    %c0_i32 = arith.constant 0 : i32
    %c0_i32_0 = arith.constant 0 : i32
    %c0_i32_1 = arith.constant 0 : i32
    return %arg0, %c0_i32, %c0_i32_0 : i32, i32, i32
  }
  func.func @transform_1(%arg0: i32) -> (i32, i32, i32) {
    %c0_i32 = arith.constant 0 : i32
    %c0_i32_0 = arith.constant 0 : i32
    %c0_i32_1 = arith.constant 0 : i32
    %c0_i32_2 = arith.constant 0 : i32
    return %c0_i32, %c0_i32_0, %c0_i32_1 : i32, i32, i32
  }
  func.func @transform_2(%arg0: i32) -> (i32, i32) {
    %c0_i32 = arith.constant 0 : i32
    %c0_i32_0 = arith.constant 0 : i32
    %c0_i32_1 = arith.constant 0 : i32
    return %c0_i32, %c0_i32_0 : i32, i32
  }
  func.func @transform_3(%arg0: i32) -> (i32, i32, i32) {
    %c0_i32 = arith.constant 0 : i32
    %c0_i32_0 = arith.constant 0 : i32
    %c0_i32_1 = arith.constant 0 : i32
    %c0_i32_2 = arith.constant 0 : i32
    return %c0_i32, %c0_i32_0, %c0_i32_1 : i32, i32, i32
  }
  func.func @transform_4(%arg0: i32) -> (i32, i32) {
    %c0_i32 = arith.constant 0 : i32
    %c0_i32_0 = arith.constant 0 : i32
    %c0_i32_1 = arith.constant 0 : i32
    return %c0_i32, %c0_i32_0 : i32, i32
  }
  func.func @transform_5(%arg0: i32) -> (i32, i32, i32) {
    %c0_i32 = arith.constant 0 : i32
    %c0_i32_0 = arith.constant 0 : i32
    %c0_i32_1 = arith.constant 0 : i32
    return %arg0, %c0_i32, %c0_i32_0 : i32, i32, i32
  }
}

</mosaic_0001>

<llo_original>
// kernel: tpu_custom_call.1
$region0: #{tpu_custom_call.1}
  #allocation0 [shape = 'u32[]', space=smem, size = 0x4, offset = 0x4, fixed_abs, tag = 'smem constant byte address 0x4 - core index']
  #allocation1 [shape = 'u32[72,128]{1,0:T(1,128)}', space=vmem, size = 0x9000, scoped, tag = 'internal scratch']
  %s0 = inlined_call_operand.hbm [shape: f32[2,8,128], index: 0, kind: input, shape index: {}]
  %s1 = inlined_call_operand.hbm [shape: f32[3,32,64], index: 1, kind: input, shape index: {}]
  %s2 = inlined_call_operand.vmem [shape: f32[1,64], index: 2, kind: input, shape index: {}]
  %s3 = inlined_call_operand.hbm [shape: f32[3,64,64], index: 3, kind: input, shape index: {}]
  %s4 = inlined_call_operand.vmem [shape: f32[1,64], index: 4, kind: input, shape index: {}]
  %s5 = inlined_call_operand.hbm [shape: f32[2,8,64], index: 5, kind: output, shape index: {}]
  %s6 = sld [smem:[#allocation0]]
  $region65: #{tpu_custom_call.1} parent=0
    _
  %s8 = ssub.s32 1, %s6
  %s9 = scalar_select 0, %s8, %s6
  $region1: #{tpu_custom_call.1} parent=0
    #allocation2 [shape = 'u8[8192]{0}', space=vmem, size = 0x2000, scoped, tag = 'input window, operand 0']
    #allocation3 [shape = 's32[2]{0}', space=sflag, size = 0x8, scoped, tag = 'scoped memory for tpu_custom_call.1']
    #allocation4 [shape = 's32[2]{0}', space=sflag, size = 0x8, scoped, tag = 'scoped memory for tpu_custom_call.1']
    #allocation5 [shape = 'u8[49152]{0}', space=vmem, size = 0xc000, scoped, tag = 'input window, operand 1, single buffered']
    #allocation6 [shape = 's32[1]{0}', space=sflag, size = 0x4, scoped, tag = 'scoped memory for tpu_custom_call.1']
    #allocation7 [shape = 'u8[98304]{0}', space=vmem, size = 0x18000, scoped, tag = 'input window, operand 3, single buffered']
    #allocation8 [shape = 'u8[8192]{0}', space=vmem, size = 0x2000, scoped, tag = 'output window, operand 0']
    %10 = vsyncpa [#allocation3], 0
    %s11 = scalar_lea.sflag [#allocation3], 1
    %12 = vsyncpa %s11, 0
    %13 = vsyncpa [#allocation6], 0
    %14 = vsyncpa [#allocation4], 0
    %s15 = scalar_lea.sflag [#allocation4], 1
    %16 = vsyncpa %s15, 0
    loop: start=0, step=1, limit=4
    $region2: #{tpu_custom_call.1} parent=1 // loop_pre_header
      _
    $region3: #{tpu_custom_call.1} parent=1 // loop_header
      %s18 = sphi 0, %s22
      %p19 = scmp.ge.s32.totalorder %s18, 4
      %s28 = sphi 0, %s30
      %s31 = sphi 0, %s28
      %s32 = sphi 0, %s31
      %s48 = sphi 0, %s32
      %s52 = sphi 0, %s52
      %s54 = sphi 0, %s52
      %s55 = sphi 0, %s54
      %s69 = sphi 0, %s55
      %s73 = sphi 0, %s73
      %s75 = sphi 0, %s73
      %s76 = sphi 0, %s75
      %s90 = sphi 0, %s76
      %s94 = sphi 0, %s94
      %s96 = sphi 0, %s94
      %s97 = sphi 0, %s96
      %s111 = sphi 0, %s97
      %s115 = sphi 0, %s115
      %s117 = sphi 0, %s115
      %s118 = sphi 0, %s117
      %s132 = sphi 0, %s118
      %s138 = sphi 0, %s140
      %s141 = sphi 0, %s138
      %s142 = sphi 0, %s141
      %s158 = sphi 0, %s142
    $region4: #{tpu_custom_call.1} parent=1 // loop_header_branch
      %21 = sbr.rel (%p19) target = $region8
    $region5: #{tpu_custom_call.1} parent=1 // loop_body
      %s23 = ssub.s32 %s18, 1
      %s24 = ssub.s32 %s18, 2
      %s25 = sadd.s32 %s18, 1
      %s26 = ssub.s32 %s18, %s25
      %p27 = scmp.eq.s32.totalorder %s26, 0
      %s29 = sadd.s32 %s28, 1
      %s30 = scalar_select %p27, %s28, %s29
      %p33 = pneg %p27
      %p34 = scmp.eq.s32.totalorder %s18, 1
      %p35 = por %p33, %p34
      %p36 = scmp.ne.s32.totalorder %s28, %s31
      %p37 = scmp.eq.s32.totalorder %s18, 0
      %p38 = por %p36, %p37
      %p39 = scmp.ne.s32.totalorder %s28, %s31
      %p40 = scmp.eq.s32.totalorder %s23, 1
      %p41 = por %p39, %p40
      %p42 = scmp.ne.s32.totalorder %s31, %s32
      %p43 = scmp.eq.s32.totalorder %s23, 0
      %p44 = por %p42, %p43
      %p45 = scmp.ne.s32.totalorder %s31, %s32
      %p46 = scmp.eq.s32.totalorder %s24, 1
      %p47 = por %p45, %p46
      %p49 = scmp.ne.s32.totalorder %s32, %s48
      %p50 = scmp.eq.s32.totalorder %s24, 0
      %p51 = por %p49, %p50
      %s53 = sadd.s32 %s52, 1
      %p56 = scmp.eq.s32.totalorder %s18, 1
      %p57 = scmp.ne.s32.totalorder %s52, %s54
      %p58 = scmp.eq.s32.totalorder %s18, 0
      %p59 = por %p57, %p58
      %p60 = scmp.ne.s32.totalorder %s52, %s54
      %p61 = scmp.eq.s32.totalorder %s23, 1
      %p62 = por %p60, %p61
      %p63 = scmp.ne.s32.totalorder %s54, %s55
      %p64 = scmp.eq.s32.totalorder %s23, 0
      %p65 = por %p63, %p64
      %p66 = scmp.ne.s32.totalorder %s54, %s55
      %p67 = scmp.eq.s32.totalorder %s24, 1
      %p68 = por %p66, %p67
      %p70 = scmp.ne.s32.totalorder %s55, %s69
      %p71 = scmp.eq.s32.totalorder %s24, 0
      %p72 = por %p70, %p71
      %s74 = sadd.s32 %s73, 1
      %p77 = scmp.eq.s32.totalorder %s18, 1
      %p78 = scmp.ne.s32.totalorder %s73, %s75
      %p79 = scmp.eq.s32.totalorder %s18, 0
      %p80 = por %p78, %p79
      %p81 = scmp.ne.s32.totalorder %s73, %s75
      %p82 = scmp.eq.s32.totalorder %s23, 1
      %p83 = por %p81, %p82
      %p84 = scmp.ne.s32.totalorder %s75, %s76
      %p85 = scmp.eq.s32.totalorder %s23, 0
      %p86 = por %p84, %p85
      %p87 = scmp.ne.s32.totalorder %s75, %s76
      %p88 = scmp.eq.s32.totalorder %s24, 1
      %p89 = por %p87, %p88
      %p91 = scmp.ne.s32.totalorder %s76, %s90
      %p92 = scmp.eq.s32.totalorder %s24, 0
      %p93 = por %p91, %p92
      %s95 = sadd.s32 %s94, 1
      %p98 = scmp.eq.s32.totalorder %s18, 1
      %p99 = scmp.ne.s32.totalorder %s94, %s96
      %p100 = scmp.eq.s32.totalorder %s18, 0
      %p101 = por %p99, %p100
      %p102 = scmp.ne.s32.totalorder %s94, %s96
      %p103 = scmp.eq.s32.totalorder %s23, 1
      %p104 = por %p102, %p103
      %p105 = scmp.ne.s32.totalorder %s96, %s97
      %p106 = scmp.eq.s32.totalorder %s23, 0
      %p107 = por %p105, %p106
      %p108 = scmp.ne.s32.totalorder %s96, %s97
      %p109 = scmp.eq.s32.totalorder %s24, 1
      %p110 = por %p108, %p109
      %p112 = scmp.ne.s32.totalorder %s97, %s111
      %p113 = scmp.eq.s32.totalorder %s24, 0
      %p114 = por %p112, %p113
      %s116 = sadd.s32 %s115, 1
      %p119 = scmp.eq.s32.totalorder %s18, 1
      %p120 = scmp.ne.s32.totalorder %s115, %s117
      %p121 = scmp.eq.s32.totalorder %s18, 0
      %p122 = por %p120, %p121
      %p123 = scmp.ne.s32.totalorder %s115, %s117
      %p124 = scmp.eq.s32.totalorder %s23, 1
      %p125 = por %p123, %p124
      %p126 = scmp.ne.s32.totalorder %s117, %s118
      %p127 = scmp.eq.s32.totalorder %s23, 0
      %p128 = por %p126, %p127
      %p129 = scmp.ne.s32.totalorder %s117, %s118
      %p130 = scmp.eq.s32.totalorder %s24, 1
      %p131 = por %p129, %p130
      %p133 = scmp.ne.s32.totalorder %s118, %s132
      %p134 = scmp.eq.s32.totalorder %s24, 0
      %p135 = por %p133, %p134
      %s136 = ssub.s32 %s18, %s25
      %p137 = scmp.eq.s32.totalorder %s136, 0
      %s139 = sadd.s32 %s138, 1
      %s140 = scalar_select %p137, %s138, %s139
      %p143 = pneg %p137
      %p144 = scmp.eq.s32.totalorder %s18, 1
      %p145 = por %p143, %p144
      %p146 = scmp.ne.s32.totalorder %s138, %s141
      %p147 = scmp.eq.s32.totalorder %s18, 0
      %p148 = por %p146, %p147
      %p149 = scmp.ne.s32.totalorder %s138, %s141
      %p150 = scmp.eq.s32.totalorder %s23, 1
      %p151 = por %p149, %p150
      %p152 = scmp.ne.s32.totalorder %s141, %s142
      %p153 = scmp.eq.s32.totalorder %s23, 0
      %p154 = por %p152, %p153
      %p155 = scmp.ne.s32.totalorder %s141, %s142
      %p156 = scmp.eq.s32.totalorder %s24, 1
      %p157 = por %p155, %p156
      %p159 = scmp.ne.s32.totalorder %s142, %s158
      %p160 = scmp.eq.s32.totalorder %s24, 0
      %p161 = por %p159, %p160
      %p162 = scmp.le.s32.totalorder 1, %s18
      %p163 = scmp.lt.s32.totalorder %s18, 3
      %p164 = pnand %p162, %p163
      %p165 = pneg %p164
      // Predicated region
      $region9: #{tpu_custom_call.1} parent=5 // pred_check
        _
      $region10: #{tpu_custom_call.1} parent=5 // pred_check_branch
        %167 = sbr.rel (%p164) target = $region12
      $region11: #{tpu_custom_call.1} parent=5 // pred_region
        %s168 = ssub.s32 %s18, 1
        // Predicated region
        $region13: #{tpu_custom_call.1} parent=11 // pred_check
          %p169 = pneg %p65
        $region14: #{tpu_custom_call.1} parent=11 // pred_check_branch
          %171 = sbr.rel (%p169) target = $region16
        $region15: #{tpu_custom_call.1} parent=11 // pred_region
          %173 = vsyncadd [#allocation6], 0
          %s174 = sshll.u32 %s1, 4
          %s175 = int_to_ptr.hbm [resolvable:$true] %s174
          %s176 = sshll.u32 [#allocation5], 4
          %s177 = int_to_ptr.vmem [resolvable:$true] %s176
          %182 = dma.hbm_to_vmem [thread:$0]  %s175, 1536, %s177, [#allocation6], 128, 128, 8
        $region16: #{tpu_custom_call.1} parent=11 // pred_fallthru
          _
        // Predicated region
        $region17: #{tpu_custom_call.1} parent=11 // pred_check
          %p183 = pneg %p86
        $region18: #{tpu_custom_call.1} parent=11 // pred_check_branch
          %185 = sbr.rel (%p183) target = $region20
        $region19: #{tpu_custom_call.1} parent=11 // pred_region
          _
        $region20: #{tpu_custom_call.1} parent=11 // pred_fallthru
          _
        // Predicated region
        $region21: #{tpu_custom_call.1} parent=11 // pred_check
          %p186 = pneg %p107
        $region22: #{tpu_custom_call.1} parent=11 // pred_check_branch
          %188 = sbr.rel (%p186) target = $region24
        $region23: #{tpu_custom_call.1} parent=11 // pred_region
          %190 = vsyncadd [#allocation6], 0
          %s191 = sshll.u32 %s3, 4
          %s192 = int_to_ptr.hbm [resolvable:$true] %s191
          %s193 = sshll.u32 [#allocation7], 4
          %s194 = int_to_ptr.vmem [resolvable:$true] %s193
          %199 = dma.hbm_to_vmem [thread:$0]  %s192, 3072, %s194, [#allocation6], 128, 128, 8
        $region24: #{tpu_custom_call.1} parent=11 // pred_fallthru
          _
        // Predicated region
        $region25: #{tpu_custom_call.1} parent=11 // pred_check
          %p200 = pneg %p128
        $region26: #{tpu_custom_call.1} parent=11 // pred_check_branch
          %202 = sbr.rel (%p200) target = $region28
        $region27: #{tpu_custom_call.1} parent=11 // pred_region
          _
        $region28: #{tpu_custom_call.1} parent=11 // pred_fallthru
          _
      $region12: #{tpu_custom_call.1} parent=5 // pred_fallthru
        _
      %p203 = scmp.lt.s32.totalorder %s18, 2
      // Predicated region
      $region29: #{tpu_custom_call.1} parent=5 // pred_check
        %p204 = pneg %p203
      $region30: #{tpu_custom_call.1} parent=5 // pred_check_branch
        %206 = sbr.rel (%p204) target = $region32
      $region31: #{tpu_custom_call.1} parent=5 // pred_region
        // Predicated region
        $region33: #{tpu_custom_call.1} parent=31 // pred_check
          %p207 = pneg %p38
        $region34: #{tpu_custom_call.1} parent=31 // pred_check_branch
          %209 = sbr.rel (%p207) target = $region36
        $region35: #{tpu_custom_call.1} parent=31 // pred_region
          %s210 = sand.u32 %s28, 1
          %s211 = scalar_lea.sflag [#allocation3], %s210
          %s212 = sand.u32 %s28, 1
          %s213 = smul.addr %s212, 8
          %s214 = scalar_lea.vmem [#allocation2], %s213
          %216 = vsyncadd %s211, 0
          %s217 = smul.addr %s18, 8
          %s218 = scalar_lea.hbm %s0, %s217
          %s220 = sshll.u32 %s218, 4
          %s221 = int_to_ptr.hbm [resolvable:$true] %s220
          %s222 = sshll.u32 %s214, 4
          %s223 = int_to_ptr.vmem [resolvable:$true] %s222
          %225 = dma.hbm_to_vmem [thread:$0]  %s221, 128, %s223, %s211
        $region36: #{tpu_custom_call.1} parent=31 // pred_fallthru
          _
      $region32: #{tpu_custom_call.1} parent=5 // pred_fallthru
        _
      %p226 = scmp.le.s32.totalorder 1, %s18
      %p227 = scmp.lt.s32.totalorder %s18, 3
      %p228 = pnand %p226, %p227
      %p229 = pneg %p228
      // Predicated region
      $region37: #{tpu_custom_call.1} parent=5 // pred_check
        _
      $region38: #{tpu_custom_call.1} parent=5 // pred_check_branch
        %231 = sbr.rel (%p228) target = $region40
      $region39: #{tpu_custom_call.1} parent=5 // pred_region
        %s232 = ssub.s32 %s18, 1
        %s233 = sand.u32 %s31, 1
        %s234 = scalar_lea.sflag [#allocation3], %s233
        %s235 = sand.u32 %s31, 1
        %s236 = smul.addr %s235, 8
        %s237 = scalar_lea.vmem [#allocation2], %s236
        // Predicated region
        $region41: #{tpu_custom_call.1} parent=39 // pred_check
          %p238 = pneg %p44
        $region42: #{tpu_custom_call.1} parent=39 // pred_check_branch
          %240 = sbr.rel (%p238) target = $region44
        $region43: #{tpu_custom_call.1} parent=39 // pred_region
          %242 = dma.done %s234, 128
        $region44: #{tpu_custom_call.1} parent=39 // pred_fallthru
          _
        // Predicated region
        $region45: #{tpu_custom_call.1} parent=39 // pred_check
          %p243 = pneg %p65
        $region46: #{tpu_custom_call.1} parent=39 // pred_check_branch
          %245 = sbr.rel (%p243) target = $region48
        $region47: #{tpu_custom_call.1} parent=39 // pred_region
          %247 = dma.done [#allocation6], 1536
        $region48: #{tpu_custom_call.1} parent=39 // pred_fallthru
          _
        // Predicated region
        $region49: #{tpu_custom_call.1} parent=39 // pred_check
          %p248 = pneg %p107
        $region50: #{tpu_custom_call.1} parent=39 // pred_check_branch
          %250 = sbr.rel (%p248) target = $region52
        $region51: #{tpu_custom_call.1} parent=39 // pred_region
          %252 = dma.done [#allocation6], 3072
        $region52: #{tpu_custom_call.1} parent=39 // pred_fallthru
          _
        %s253 = sand.u32 %s31, 1
        %s254 = scalar_lea.sflag [#allocation3], %s253
        %s255 = sand.u32 %s31, 1
        %s256 = smul.addr %s255, 8
        %s257 = scalar_lea.vmem [#allocation2], %s256
        %p258 = pneg %p44
        %p259 = pneg %p41
        %p260 = pneg %p65
        %p261 = pneg %p62
        %p262 = pneg %p86
        %p263 = pneg %p83
        %p264 = pneg %p107
        %p265 = pneg %p104
        %p266 = pneg %p128
        %p267 = pneg %p125
        %p268 = pneg %p154
        %p269 = pneg %p151
        %s270 = sand.u32 %s141, 1
        %s271 = scalar_lea.sflag [#allocation4], %s270
        %s272 = sand.u32 %s141, 1
        %s273 = smul.addr %s272, 8
        %s274 = scalar_lea.vmem [#allocation8], %s273
        %v275 = vld [vmem:[%s237] sm:$0xff]
        %277 = vrot.lane.b32.xlu0 %v275, 96
        %v278 = vpop.permute.xlu0 %277
        %v280 = vmax.f32 %v275, %v278
        %282 = vrot.lane.b32.xlu0 %v280, 64
        %v283 = vpop.permute.xlu0 %282
        %v285 = vmax.f32 %v280, %v283
        %v287 = vrot.slane %v285, 7
        %vm289 = vcmask 1040384
        %v290 = vsel %vm289, 0.0, %v287
        %v291 = vsel %vm289, %v287, 0.0
        %v292 = vld [vmem:[#allocation5] sm:$0xff]
        %v293 = vld [vmem:[#allocation5 + $0x8] sm:$0xff]
        %v294 = vld [vmem:[#allocation5 + $0x10] sm:$0xff]
        %v295 = vld [vmem:[#allocation5 + $0x18] sm:$0xff]
        %s296 = scalar_lea.vmem [#allocation5], 32
        %v297 = vld [vmem:[%s296] sm:$0xff]
        %v298 = vld [vmem:[%s296 + $0x8] sm:$0xff]
        %v299 = vld [vmem:[%s296 + $0x10] sm:$0xff]
        %v300 = vld [vmem:[%s296 + $0x18] sm:$0xff]
        %vm303 = vcmask 1046528
        %v304 = vrot.slane %v290, 1
        %v305 = vrot.slane %v291, 1
        %v306 = vsel %vm303, %v304, %v305
        %vm307 = vcmask 261120
        %v308 = vsel %vm307, %v306, 0
        %310 = vmatpush.msra.mxu0 0.0
        %311 = vmatpush.msra.mxu0 0.0
        %312 = vmatpush.msra.mxu0 0.0
        %313 = vmatpush.msra.mxu0 0.0
        %314 = vmatpush.msra.mxu0 0.0
        %315 = vmatpush.msra.mxu0 0.0
        %316 = vmatpush.msra.mxu0 0.0
        %317 = vmatpush.msra.mxu0 0.0
        %318 = vmatpush.msra.mxu0 0.0
        %319 = vmatpush.msra.mxu0 0.0
        %320 = vmatpush.msra.mxu0 0.0
        %321 = vmatpush.msra.mxu0 0.0
        %322 = vmatpush.msra.mxu0 %v300
        %323 = vmatpush.msra.mxu0 %v299
        %324 = vmatpush.msra.mxu0 %v298
        %325 = vmatpush.msra.mxu0 %v297
        %326 = vmatmul.f32.gmra.mxu0 %v308
        %v327 = vpop.f32.mrf.mxu0
        %v328 = vadd.f32 0.0, %v327
        %329 = vdwg.mxu0
        %v330 = vsel %vm307, %v290, 0
        %332 = vmatpush.msra.mxu0 0.0
        %333 = vmatpush.msra.mxu0 0.0
        %334 = vmatpush.msra.mxu0 0.0
        %335 = vmatpush.msra.mxu0 0.0
        %336 = vmatpush.msra.mxu0 0.0
        %337 = vmatpush.msra.mxu0 0.0
        %338 = vmatpush.msra.mxu0 0.0
        %339 = vmatpush.msra.mxu0 0.0
        %340 = vmatpush.msra.mxu0 0.0
        %341 = vmatpush.msra.mxu0 0.0
        %342 = vmatpush.msra.mxu0 0.0
        %343 = vmatpush.msra.mxu0 0.0
        %344 = vmatpush.msra.mxu0 %v295
        %345 = vmatpush.msra.mxu0 %v294
        %346 = vmatpush.msra.mxu0 %v293
        %347 = vmatpush.msra.mxu0 %v292
        %348 = vmatmul.f32.gmra.mxu0 %v330
        %v349 = vpop.f32.mrf.mxu0
        %v350 = vadd.f32 %v328, %v349
        %351 = vdwg.mxu0
        %s352 = scalar_lea.vmem [#allocation5], 64
        %v353 = vld [vmem:[%s352] sm:$0xff]
        %v354 = vld [vmem:[%s352 + $0x8] sm:$0xff]
        %v355 = vld [vmem:[%s352 + $0x10] sm:$0xff]
        %v356 = vld [vmem:[%s352 + $0x18] sm:$0xff]
        %vm357 = vcmask 1045504
        %v358 = vrot.slane %v290, 2
        %v359 = vrot.slane %v291, 2
        %v360 = vsel %vm357, %v358, %v359
        %v361 = vsel %vm307, %v360, 0
        %363 = vmatpush.msra.mxu0 0.0
        %364 = vmatpush.msra.mxu0 0.0
        %365 = vmatpush.msra.mxu0 0.0
        %366 = vmatpush.msra.mxu0 0.0
        %367 = vmatpush.msra.mxu0 0.0
        %368 = vmatpush.msra.mxu0 0.0
        %369 = vmatpush.msra.mxu0 0.0
        %370 = vmatpush.msra.mxu0 0.0
        %371 = vmatpush.msra.mxu0 0.0
        %372 = vmatpush.msra.mxu0 0.0
        %373 = vmatpush.msra.mxu0 0.0
        %374 = vmatpush.msra.mxu0 0.0
        %375 = vmatpush.msra.mxu0 %v356
        %376 = vmatpush.msra.mxu0 %v355
        %377 = vmatpush.msra.mxu0 %v354
        %378 = vmatpush.msra.mxu0 %v353
        %379 = vmatmul.f32.gmra.mxu0 %v361
        %v380 = vpop.f32.mrf.mxu0
        %v381 = vadd.f32 0.0, %v380
        %382 = vdwg.mxu0
        %v383 = vadd.f32 %v350, %v381
        %v384 = vld [vmem:[%s2] sm:$0x1]
        %v386 = vperm.slane %v384, 0
        %v388 = vadd.f32 %v383, %v386
        %v389 = vmax.f32 %v388, 0.0
        %v391 = vrot.slane %v389, 7
        %v393 = vsel %vm289, 0.0, %v391
        %v394 = vsel %vm289, %v391, 0.0
        %v395 = vld [vmem:[#allocation7] sm:$0xff]
        %v396 = vld [vmem:[#allocation7 + $0x8] sm:$0xff]
        %v397 = vld [vmem:[#allocation7 + $0x10] sm:$0xff]
        %v398 = vld [vmem:[#allocation7 + $0x18] sm:$0xff]
        %v399 = vld [vmem:[#allocation7 + $0x20] sm:$0xff]
        %v400 = vld [vmem:[#allocation7 + $0x28] sm:$0xff]
        %v401 = vld [vmem:[#allocation7 + $0x30] sm:$0xff]
        %v402 = vld [vmem:[#allocation7 + $0x38] sm:$0xff]
        %s403 = scalar_lea.vmem [#allocation7], 64
        %v404 = vld [vmem:[%s403] sm:$0xff]
        %v405 = vld [vmem:[%s403 + $0x8] sm:$0xff]
        %v406 = vld [vmem:[%s403 + $0x10] sm:$0xff]
        %v407 = vld [vmem:[%s403 + $0x18] sm:$0xff]
        %v408 = vld [vmem:[%s403 + $0x20] sm:$0xff]
        %v409 = vld [vmem:[%s403 + $0x28] sm:$0xff]
        %v410 = vld [vmem:[%s403 + $0x30] sm:$0xff]
        %v411 = vld [vmem:[%s403 + $0x38] sm:$0xff]
        %v414 = vrot.slane %v393, 1
        %v415 = vrot.slane %v394, 1
        %v416 = vsel %vm303, %v414, %v415
        %vm417 = vcmask 523264
        %v418 = vsel %vm417, %v416, 0
        %420 = vmatpush.msra.mxu0 0.0
        %421 = vmatpush.msra.mxu0 0.0
        %422 = vmatpush.msra.mxu0 0.0
        %423 = vmatpush.msra.mxu0 0.0
        %424 = vmatpush.msra.mxu0 0.0
        %425 = vmatpush.msra.mxu0 0.0
        %426 = vmatpush.msra.mxu0 0.0
        %427 = vmatpush.msra.mxu0 0.0
        %428 = vmatpush.msra.mxu0 %v411
        %429 = vmatpush.msra.mxu0 %v410
        %430 = vmatpush.msra.mxu0 %v409
        %431 = vmatpush.msra.mxu0 %v408
        %432 = vmatpush.msra.mxu0 %v407
        %433 = vmatpush.msra.mxu0 %v406
        %434 = vmatpush.msra.mxu0 %v405
        %435 = vmatpush.msra.mxu0 %v404
        %436 = vmatmul.f32.gmra.mxu0 %v418
        %v437 = vpop.f32.mrf.mxu0
        %v438 = vadd.f32 0.0, %v437
        %439 = vdwg.mxu0
        %v440 = vsel %vm417, %v393, 0
        %442 = vmatpush.msra.mxu0 0.0
        %443 = vmatpush.msra.mxu0 0.0
        %444 = vmatpush.msra.mxu0 0.0
        %445 = vmatpush.msra.mxu0 0.0
        %446 = vmatpush.msra.mxu0 0.0
        %447 = vmatpush.msra.mxu0 0.0
        %448 = vmatpush.msra.mxu0 0.0
        %449 = vmatpush.msra.mxu0 0.0
        %450 = vmatpush.msra.mxu0 %v402
        %451 = vmatpush.msra.mxu0 %v401
        %452 = vmatpush.msra.mxu0 %v400
        %453 = vmatpush.msra.mxu0 %v399
        %454 = vmatpush.msra.mxu0 %v398
        %455 = vmatpush.msra.mxu0 %v397
        %456 = vmatpush.msra.mxu0 %v396
        %457 = vmatpush.msra.mxu0 %v395
        %458 = vmatmul.f32.gmra.mxu0 %v440
        %v459 = vpop.f32.mrf.mxu0
        %v460 = vadd.f32 %v438, %v459
        %461 = vdwg.mxu0
        %s462 = scalar_lea.vmem [#allocation7], 128
        %v463 = vld [vmem:[%s462] sm:$0xff]
        %v464 = vld [vmem:[%s462 + $0x8] sm:$0xff]
        %v465 = vld [vmem:[%s462 + $0x10] sm:$0xff]
        %v466 = vld [vmem:[%s462 + $0x18] sm:$0xff]
        %v467 = vld [vmem:[%s462 + $0x20] sm:$0xff]
        %v468 = vld [vmem:[%s462 + $0x28] sm:$0xff]
        %v469 = vld [vmem:[%s462 + $0x30] sm:$0xff]
        %v470 = vld [vmem:[%s462 + $0x38] sm:$0xff]
        %v471 = vrot.slane %v393, 2
        %v472 = vrot.slane %v394, 2
        %v473 = vsel %vm357, %v471, %v472
        %v474 = vsel %vm417, %v473, 0
        %476 = vmatpush.msra.mxu0 0.0
        %477 = vmatpush.msra.mxu0 0.0
        %478 = vmatpush.msra.mxu0 0.0
        %479 = vmatpush.msra.mxu0 0.0
        %480 = vmatpush.msra.mxu0 0.0
        %481 = vmatpush.msra.mxu0 0.0
        %482 = vmatpush.msra.mxu0 0.0
        %483 = vmatpush.msra.mxu0 0.0
        %484 = vmatpush.msra.mxu0 %v470
        %485 = vmatpush.msra.mxu0 %v469
        %486 = vmatpush.msra.mxu0 %v468
        %487 = vmatpush.msra.mxu0 %v467
        %488 = vmatpush.msra.mxu0 %v466
        %489 = vmatpush.msra.mxu0 %v465
        %490 = vmatpush.msra.mxu0 %v464
        %491 = vmatpush.msra.mxu0 %v463
        %492 = vmatmul.f32.gmra.mxu0 %v474
        %v493 = vpop.f32.mrf.mxu0
        %v494 = vadd.f32 0.0, %v493
        %495 = vdwg.mxu0
        %v496 = vadd.f32 %v460, %v494
        %v497 = vld [vmem:[%s4] sm:$0x1]
        %v499 = vperm.slane %v497, 0
        %v501 = vadd.f32 %v496, %v499
        %v502 = vmax.f32 %v501, 0.0
        %503 = vst.msk [vmem:[%s274] sm:$0xff] %vm417, %v502
        %s504 = sand.u32 %s141, 1
        %s505 = scalar_lea.sflag [#allocation4], %s504
        %s506 = sand.u32 %s141, 1
        %s507 = smul.addr %s506, 8
        %s508 = scalar_lea.vmem [#allocation8], %s507
        // Predicated region
        $region53: #{tpu_custom_call.1} parent=39 // pred_check
          %p509 = pneg %p151
        $region54: #{tpu_custom_call.1} parent=39 // pred_check_branch
          %511 = sbr.rel (%p509) target = $region56
        $region55: #{tpu_custom_call.1} parent=39 // pred_region
          %513 = vsyncadd %s505, 0
          %s514 = smul.addr %s23, 8
          %s515 = scalar_lea.hbm %s5, %s514
          %s517 = sshll.u32 %s508, 4
          %s518 = int_to_ptr.vmem [resolvable:$true] %s517
          %s519 = sshll.u32 %s515, 4
          %s520 = int_to_ptr.hbm [resolvable:$true] %s519
          %522 = dma.vmem_to_hbm [thread:$0]  %s518, 128, %s520, %s505
        $region56: #{tpu_custom_call.1} parent=39 // pred_fallthru
          _
      $region40: #{tpu_custom_call.1} parent=5 // pred_fallthru
        _
      %p523 = scmp.le.s32.totalorder 2, %s18
      // Predicated region
      $region57: #{tpu_custom_call.1} parent=5 // pred_check
        %p524 = pneg %p523
      $region58: #{tpu_custom_call.1} parent=5 // pred_check_branch
        %526 = sbr.rel (%p524) target = $region60
      $region59: #{tpu_custom_call.1} parent=5 // pred_region
        %s527 = ssub.s32 %s18, 2
        // Predicated region
        $region61: #{tpu_custom_call.1} parent=59 // pred_check
          %p528 = pneg %p157
        $region62: #{tpu_custom_call.1} parent=59 // pred_check_branch
          %530 = sbr.rel (%p528) target = $region64
        $region63: #{tpu_custom_call.1} parent=59 // pred_region
          %s531 = sand.u32 %s142, 1
          %s532 = scalar_lea.sflag [#allocation4], %s531
          %s533 = sand.u32 %s142, 1
          %s534 = smul.addr %s533, 8
          %s535 = scalar_lea.vmem [#allocation8], %s534
          %537 = dma.done %s532, 128
        $region64: #{tpu_custom_call.1} parent=59 // pred_fallthru
          _
      $region60: #{tpu_custom_call.1} parent=5 // pred_fallthru
        _
    $region6: #{tpu_custom_call.1} parent=1 // loop_footer
      %s22 = sadd.s32 1, %s18
    $region7: #{tpu_custom_call.1} parent=1 // loop_footer_branch
      %17 = sbr.rel target = $region3
    $region8: #{tpu_custom_call.1} parent=1 // loop_exit
      _
    %538 = vsyncpa [#allocation3], 1
    %s539 = scalar_lea.sflag [#allocation3], 1
    %540 = vsyncpa %s539, 1
    %541 = vsyncpa [#allocation6], 1
    %542 = vsyncpa [#allocation4], 1
    %s543 = scalar_lea.sflag [#allocation4], 1
    %544 = vsyncpa %s543, 1

</llo_original>
